<compile_context>
chip_gen: v7x
topology: tpu7x:2x2x1
jax: 0.10.0
libtpu: 0.0.40
codegen_flags: <defaults>
</compile_context>

<pallas_src>
import functools

import jax
import jax.numpy as jnp
from jax.experimental import pallas as pl
from jax.experimental.pallas import tpu as pltpu

_LANE = 128


def _round_up(x, m):
    return ((x + m - 1) // m) * m


def _vmem_limit_bytes():
    """Per-generation scoped-VMEM cap (~70% of physical VMEM per core)."""
    try:
        cap = int(pltpu.get_tpu_info().vmem_capacity_bytes)
    except Exception:  # conservative fallback that is valid on every TPU gen
        cap = 64 * 1024 * 1024
    return max(32 * 1024 * 1024, int(cap * 0.7))


def _pick_row_tile(H_out, W_out_p, W_in_p, P, halo_h, C_p, Cout_p, T, budget):
    """Largest output-row tile whose pass-1 working set fits in `budget`."""
    cap = _round_up(H_out, 8)
    for rt in (1024, 512, 256, 128, 64, 32, 16, 8):
        rt = min(rt, cap)
        rt_in = rt + halo_h
        need = (2 * P * rt_in * W_in_p * C_p * 2      # input tile (dbl-buffered)
                + 2 * rt * W_out_p * Cout_p * 2       # conv-out tile (dbl-buffered)
                + 2 * T * C_p * Cout_p * 2            # resident weights
                + rt * W_out_p * Cout_p * 4           # f32 accumulator
                + 2 * rt * W_out_p * C_p * 2)         # per-tap patch temporaries
        if need <= budget:
            return rt
    return 8


def _pick_apply_rows(H_pad, RT, W_out_p, Cout_p, in_bytes, out_bytes, budget):
    """Largest multiple of RT dividing H_pad whose pass-2 blocks fit `budget`."""
    k = H_pad // RT
    for m in range(k, 0, -1):
        if k % m:
            continue
        rows = m * RT
        if 2 * rows * W_out_p * Cout_p * (in_bytes + out_bytes) <= budget:
            return rows
    return RT


def _conv_stats_kernel(x_ref, w_ref, y_ref, stats_ref, *, taps, H_out, W_out):
    """Row-tiled conv + per-tile per-channel sum / sum-of-squares.

    x_ref:     (P, RT_in, W_in_p, C_p)  halo'd bf16 input row tile
    w_ref:     (T*C_p, Cout_p)          repacked bf16 weights (resident)
    y_ref:     (RT, W_out_p, Cout_p)    lane-dense bf16 conv output tile
    stats_ref: (2, Cout_p) f32          row0 = sum, row1 = sum(x^2) of this tile
    """
    RT, W_out_p, Cout_p = y_ref.shape
    C_p = x_ref.shape[-1]
    r = pl.program_id(1)

    acc = jnp.zeros((RT * W_out_p, Cout_p), dtype=jnp.float32)
    for (p, dh, dw, widx) in taps:
        patch = x_ref[p, dh:dh + RT, dw:dw + W_out_p, :]
        # W_out_p % 8 == 0 and C_p % 128 == 0 -> layout-preserving flatten.
        patch = patch.reshape(RT * W_out_p, C_p)
        w_slc = w_ref[widx * C_p:(widx + 1) * C_p, :]
        acc = acc + jnp.dot(patch, w_slc, preferred_element_type=jnp.float32)

    acc3 = acc.reshape(RT, W_out_p, Cout_p)
    y_ref[...] = acc3.astype(y_ref.dtype)

    # Statistics over valid output positions only (right/bottom padding of the
    # lane-dense tile must not contribute to the batch statistics).
    rows = jax.lax.broadcasted_iota(jnp.int32, (RT, W_out_p, 1), 0)
    cols = jax.lax.broadcasted_iota(jnp.int32, (RT, W_out_p, 1), 1)
    valid = ((rows + r * RT) < H_out) & (cols < W_out)
    accm = jnp.where(valid, acc3, 0.0)
    s1 = jnp.sum(accm, axis=(0, 1), keepdims=True)[0]          # (1, Cout_p)
    s2 = jnp.sum(accm * accm, axis=(0, 1), keepdims=True)[0]   # (1, Cout_p)
    stats_ref[...] = jnp.concatenate([s1, s2], axis=0)


def _bn_apply_kernel(y_ref, scale_ref, shift_ref, o_ref, *, relu,
                     negative_slope):
    # y_ref: (TH, W_out_p, Cout_p) bf16; scale/shift: (1, Cout_p) folded BN.
    y = y_ref[...].astype(jnp.float32)
    out = y * scale_ref[...] + shift_ref[...]
    if relu:
        out = jnp.where(out > 0, out, negative_slope * out)
    o_ref[...] = out.astype(o_ref.dtype)


def conv2d_batchnorm_nhwc(x_nhwc, weight_oihw, gamma, beta, *, stride=1,
                          relu=True, same_padding=False, eps=1e-5,
                          negative_slope=0.1, out_dtype=None):
    """Fused Conv2d(bias=False) + BatchNorm2d(train) + LeakyReLU, NHWC in/out."""
    N, H, W, C_in = x_nhwc.shape
    C_out, C_in_w, K, K2 = weight_oihw.shape
    assert C_in == C_in_w and K == K2
    out_dtype = x_nhwc.dtype if out_dtype is None else out_dtype

    s = int(stride)
    pad = (K - 1) // 2 if same_padding else 0
    H_out = (H + 2 * pad - K) // s + 1
    W_out = (W + 2 * pad - K) // s + 1
    Cout_p = _round_up(C_out, _LANE)
    W_out_p = _round_up(W_out, 8)

    vmem_limit = _vmem_limit_bytes()
    use_im2col = (K * K * C_in) <= 256      # small-C_in layers (e.g. first conv)

    if use_im2col:
        C_p = _round_up(K * K * C_in, _LANE)
        P, T, halo_h = 1, 1, 0
        W_in_p = W_out_p
    else:
        C_p = _round_up(C_in, _LANE)
        P, T, halo_h = s * s, K * K, (K - 1) // s
        W_in_p = _round_up(W_out_p + halo_h, 8)   # halo_w == halo_h

    RT = _pick_row_tile(H_out, W_out_p, W_in_p, P, halo_h, C_p, Cout_p, T,
                        vmem_limit // 2)
    n_rt = pl.cdiv(H_out, RT)
    H_pad = n_rt * RT
    RT_in = RT + halo_h

    x_bf = x_nhwc.astype(jnp.bfloat16)

    # ---- wrapper-side packing (plain-JAX glue) -----------------------------
    if use_im2col:
        xp = jnp.pad(x_bf, ((0, 0), (pad, pad), (pad, pad), (0, 0)))
        cols = []
        for kh in range(K):
            for kw in range(K):
                cols.append(xp[:, kh:kh + (H_out - 1) * s + 1:s,
                               kw:kw + (W_out - 1) * s + 1:s, :])
        patches = jnp.concatenate(cols, axis=-1)          # (N,H_out,W_out,KKCin)
        patches = jnp.pad(patches, ((0, 0), (0, H_pad - H_out),
                                    (0, W_out_p - W_out),
                                    (0, C_p - K * K * C_in)))
        x_tiles = patches.reshape(N, n_rt, 1, RT, W_out_p, C_p)

        w = jnp.transpose(weight_oihw.astype(jnp.float32), (2, 3, 1, 0))
        w = w.reshape(K * K * C_in, C_out)
        w = jnp.pad(w, ((0, C_p - K * K * C_in), (0, Cout_p - C_out)))
        w = w.astype(jnp.bfloat16)
        taps = ((0, 0, 0, 0),)
    else:
        Cin_p = C_p
        x = jnp.pad(x_bf, ((0, 0), (pad, pad), (pad, pad), (0, Cin_p - C_in)))
        Hp, Wp = H + 2 * pad, W + 2 * pad
        Hs, Ws = H_out + halo_h, W_out + halo_h
        th, tw = s * Hs, s * Ws
        x = jnp.pad(x, ((0, 0), (0, max(0, th - Hp)),
                        (0, max(0, tw - Wp)), (0, 0)))[:, :th, :tw, :]
        # Phase split (space-to-depth): strided taps become contiguous slices.
        xs = x.reshape(N, Hs, s, Ws, s, Cin_p)
        xs = jnp.transpose(xs, (0, 2, 4, 1, 3, 5)).reshape(N, P, Hs, Ws, Cin_p)
        xs = jnp.pad(xs, ((0, 0), (0, 0), (0, H_pad + halo_h - Hs),
                          (0, W_in_p - Ws), (0, 0)))
        if halo_h == 0:
            x_tiles = xs.reshape(N, P, n_rt, RT, W_in_p, Cin_p)
            x_tiles = jnp.transpose(x_tiles, (0, 2, 1, 3, 4, 5))
        else:
            idx = jnp.arange(n_rt)[:, None] * RT + jnp.arange(RT_in)[None, :]
            x_tiles = xs[:, :, idx, :, :]       # (N,P,n_rt,RT_in,W_in_p,Cin_p)
            x_tiles = jnp.transpose(x_tiles, (0, 2, 1, 3, 4, 5))

        w = jnp.transpose(weight_oihw.astype(jnp.float32), (2, 3, 1, 0))
        w = jnp.pad(w, ((0, 0), (0, 0), (0, Cin_p - C_in), (0, Cout_p - C_out)))
        w = w.reshape(K * K * Cin_p, Cout_p).astype(jnp.bfloat16)
        taps = tuple(((kh % s) * s + (kw % s), kh // s, kw // s, kh * K + kw)
                     for kh in range(K) for kw in range(K))

    # ---- pass 1: row-tiled conv + per-tile per-channel statistics ----------
    conv_out, stats = pl.pallas_call(
        functools.partial(_conv_stats_kernel, taps=taps, H_out=H_out,
                          W_out=W_out),
        out_shape=(jax.ShapeDtypeStruct((N, H_pad, W_out_p, Cout_p),
                                        jnp.bfloat16),
                   jax.ShapeDtypeStruct((N, n_rt, 2, Cout_p), jnp.float32)),
        grid=(N, n_rt),
        in_specs=[
            pl.BlockSpec((None, None, P, RT_in, W_in_p, C_p),
                         lambda n, r: (n, r, 0, 0, 0, 0)),
            pl.BlockSpec((T * C_p, Cout_p), lambda n, r: (0, 0)),
        ],
        out_specs=(
            pl.BlockSpec((None, RT, W_out_p, Cout_p),
                         lambda n, r: (n, r, 0, 0)),
            pl.BlockSpec((None, None, 2, Cout_p), lambda n, r: (n, r, 0, 0)),
        ),
        compiler_params=pltpu.CompilerParams(
            dimension_semantics=("parallel", "parallel"),
            vmem_limit_bytes=vmem_limit),
    )(x_tiles, w)

    # ---- fold BN into per-channel scale/shift (tiny, plain JAX) ------------
    count = jnp.float32(N * H_out * W_out)
    ch_sum = jnp.sum(stats[:, :, 0, :], axis=(0, 1))
    ch_sumsq = jnp.sum(stats[:, :, 1, :], axis=(0, 1))
    mean = ch_sum / count
    var = jnp.maximum(ch_sumsq / count - mean * mean, 0.0)   # biased variance
    inv = jax.lax.rsqrt(var + eps)
    gamma_p = jnp.pad(gamma.astype(jnp.float32), (0, Cout_p - C_out))
    beta_p = jnp.pad(beta.astype(jnp.float32), (0, Cout_p - C_out))
    scale = (gamma_p * inv).reshape(1, Cout_p)
    shift = (beta_p - mean * gamma_p * inv).reshape(1, Cout_p)

    # ---- pass 2: gridded apply (scale/shift + LeakyReLU), lane-dense -------
    out_bytes = jnp.dtype(out_dtype).itemsize
    TH2 = _pick_apply_rows(H_pad, RT, W_out_p, Cout_p, 2, out_bytes,
                           vmem_limit // 2)
    alias = {0: 0} if jnp.dtype(out_dtype) == jnp.bfloat16 else {}
    out = pl.pallas_call(
        functools.partial(_bn_apply_kernel, relu=relu,
                          negative_slope=negative_slope),
        out_shape=jax.ShapeDtypeStruct((N, H_pad, W_out_p, Cout_p), out_dtype),
        grid=(N, H_pad // TH2),
        in_specs=[
            pl.BlockSpec((None, TH2, W_out_p, Cout_p),
                         lambda n, r: (n, r, 0, 0)),
            pl.BlockSpec((1, Cout_p), lambda n, r: (0, 0)),
            pl.BlockSpec((1, Cout_p), lambda n, r: (0, 0)),
        ],
        out_specs=pl.BlockSpec((None, TH2, W_out_p, Cout_p),
                               lambda n, r: (n, r, 0, 0)),
        input_output_aliases=alias,
        compiler_params=pltpu.CompilerParams(
            dimension_semantics=("parallel", "parallel"),
            vmem_limit_bytes=vmem_limit),
    )(conv_out, scale, shift)

    # TODO(synk): expose the padded lane-dense slab to chained layers to avoid
    # this slice re-reading the activation when C_out % 128 != 0.
    return out[:, :H_out, :W_out, :C_out]


def conv2d_batchnorm(x_nchw, weight_oihw, gamma, beta, *, stride=1, relu=True,
                     same_padding=False, eps=1e-5, negative_slope=0.1):
    """NCHW interface matching the PyTorch module."""
    x = jnp.transpose(x_nchw, (0, 2, 3, 1))
    out = conv2d_batchnorm_nhwc(x, weight_oihw, gamma, beta, stride=stride,
                                relu=relu, same_padding=same_padding, eps=eps,
                                negative_slope=negative_slope,
                                out_dtype=x_nchw.dtype)
    return jnp.transpose(out, (0, 3, 1, 2))


def _reference(x_nchw, weight_oihw, gamma, beta, *, stride, relu,
               same_padding, eps=1e-5, negative_slope=0.1):
    K = weight_oihw.shape[-1]
    pad = (K - 1) // 2 if same_padding else 0
    y = jax.lax.conv_general_dilated(
        x_nchw, weight_oihw, window_strides=(stride, stride),
        padding=((pad, pad), (pad, pad)),
        dimension_numbers=("NCHW", "OIHW", "NCHW"))
    mean = jnp.mean(y, axis=(0, 2, 3), keepdims=True)
    var = jnp.mean((y - mean) ** 2, axis=(0, 2, 3), keepdims=True)
    y = (y - mean) * jax.lax.rsqrt(var + eps)
    y = y * gamma.reshape(1, -1, 1, 1) + beta.reshape(1, -1, 1, 1)
    if relu:
        y = jnp.where(y > 0, y, negative_slope * y)
    return y


if __name__ == "__main__":
    key = jax.random.PRNGKey(0)
    k_x1, k_w1, k_g, k_b, k_x2, k_w2 = jax.random.split(key, 6)

    # Small-C_in layer (im2col path): N=2, C_in=4, 16x16 spatial, C_out=8, K=3.
    x1 = jax.random.normal(k_x1, (2, 4, 16, 16), dtype=jnp.float32)
    w1 = 0.1 * jax.random.normal(k_w1, (8, 4, 3, 3), dtype=jnp.float32)
    # Larger-C_in layer (tap/channel-matmul path): C_in=32.
    x2 = jax.random.normal(k_x2, (2, 32, 16, 16), dtype=jnp.float32)
    w2 = 0.1 * jax.random.normal(k_w2, (8, 32, 3, 3), dtype=jnp.float32)
    gamma = 1.0 + 0.1 * jax.random.normal(k_g, (8,), dtype=jnp.float32)
    beta = 0.1 * jax.random.normal(k_b, (8,), dtype=jnp.float32)

    cases = [
        (x1, w1, dict(stride=1, relu=True, same_padding=True)),
        (x1, w1, dict(stride=2, relu=False, same_padding=True)),
        (x2, w2, dict(stride=1, relu=True, same_padding=True)),
        (x2, w2, dict(stride=2, relu=True, same_padding=False)),  # odd H_out/W_out
    ]
    for x, w, kwargs in cases:
        out = conv2d_batchnorm(x, w, gamma, beta, **kwargs)
        out = jax.block_until_ready(out)
        ref = _reference(x, w, gamma, beta, **kwargs)
        assert out.shape == ref.shape, (out.shape, ref.shape)
        # bf16 MXU operands + bf16 conv->BN intermediate => small relative err.
        assert jnp.allclose(out, ref, atol=5e-2, rtol=5e-2), (
            kwargs, float(jnp.max(jnp.abs(out - ref))))

    print("KERNEL_OK")
</pallas_src>

<mosaic_0001>
module attributes {stable_mosaic.version = 11 : i64} {
  func.func @_conv_stats_kernel(%arg0: i32, %arg1: i32, %arg2: memref<1x1x1x16x16x128xbf16, #tpu.memory_space<vmem>>, %arg3: memref<128x128xbf16, #tpu.memory_space<vmem>>, %arg4: memref<1x16x16x128xbf16, #tpu.memory_space<vmem>>, %arg5: memref<1x1x2x128xf32, #tpu.memory_space<vmem>>) attributes {dimension_semantics = [#tpu.dimension_semantics<parallel>, #tpu.dimension_semantics<parallel>], iteration_bounds = array<i64: 2, 1>, scalar_prefetch = 0 : i64, scratch_operands = 0 : i64, tpu.core_type = #tpu.core_type<tc>, window_params = [{transform_indices = @transform_0, window_bounds = array<i64: 1, 1, 1, 16, 16, 128>}, {pipeline_mode = #tpu.pipeline_mode<synchronous>, transform_indices = @transform_1, window_bounds = array<i64: 128, 128>}, {transform_indices = @transform_2, window_bounds = array<i64: 1, 16, 16, 128>}, {transform_indices = @transform_3, window_bounds = array<i64: 1, 1, 2, 128>}]} {
    %cst = arith.constant 0.000000e+00 : f32
    %0 = vector.broadcast %cst : f32 to vector<256x128xf32>
    %c0 = arith.constant 0 : index
    %c0_0 = arith.constant 0 : index
    %c0_1 = arith.constant 0 : index
    %c0_2 = arith.constant 0 : index
    %c0_3 = arith.constant 0 : index
    %c0_4 = arith.constant 0 : index
    %1 = vector.load %arg2[%c0, %c0_0, %c0_1, %c0_2, %c0_3, %c0_4] : memref<1x1x1x16x16x128xbf16, #tpu.memory_space<vmem>>, vector<1x1x1x16x16x128xbf16>
    %2 = vector.shape_cast %1 : vector<1x1x1x16x16x128xbf16> to vector<16x16x128xbf16>
    %3 = vector.shape_cast %2 : vector<16x16x128xbf16> to vector<256x128xbf16>
    %c0_5 = arith.constant 0 : index
    %c0_6 = arith.constant 0 : index
    %4 = vector.load %arg3[%c0_5, %c0_6] : memref<128x128xbf16, #tpu.memory_space<vmem>>, vector<128x128xbf16>
    %cst_7 = arith.constant dense<0.000000e+00> : vector<256x128xf32>
    %5 = tpu.matmul %3, %4, %cst_7 {dimension_numbers = #tpu.dot_dimension_numbers<[1], [0], [0], [1], [0, 0, 1, 1], [], []>} : vector<256x128xbf16>, vector<128x128xbf16>, vector<256x128xf32> -> vector<256x128xf32>
    %6 = arith.addf %0, %5 : vector<256x128xf32>
    %7 = vector.shape_cast %6 : vector<256x128xf32> to vector<16x16x128xf32>
    %8 = arith.truncf %7 : vector<16x16x128xf32> to vector<16x16x128xbf16>
    %c0_8 = arith.constant 0 : index
    %c0_9 = arith.constant 0 : index
    %c0_10 = arith.constant 0 : index
    %c0_11 = arith.constant 0 : index
    %9 = vector.load %arg4[%c0_8, %c0_9, %c0_10, %c0_11] : memref<1x16x16x128xbf16, #tpu.memory_space<vmem>>, vector<1x16x16x128xbf16>
    %10 = vector.shape_cast %9 : vector<1x16x16x128xbf16> to vector<16x16x128xbf16>
    %11 = vector.shape_cast %8 : vector<16x16x128xbf16> to vector<1x16x16x128xbf16>
    tpu.vector_store %arg4[%c0_8, %c0_9, %c0_10, %c0_11], %11 {strides = array<i32>} : memref<1x16x16x128xbf16, #tpu.memory_space<vmem>>, vector<1x16x16x128xbf16>,
    %12 = tpu.iota {dimensions = array<i32: 0>} : vector<16x16x1xi32>
    %13 = tpu.iota {dimensions = array<i32: 1>} : vector<16x16x1xi32>
    %c16_i32 = arith.constant 16 : i32
    %14 = arith.muli %arg1, %c16_i32 : i32
    %15 = vector.broadcast %14 : i32 to vector<16x16x1xi32>
    %16 = arith.addi %12, %15 : vector<16x16x1xi32>
    %c16_i32_12 = arith.constant 16 : i32
    %17 = vector.broadcast %c16_i32_12 : i32 to vector<16x16x1xi32>
    %18 = arith.cmpi slt, %16, %17 : vector<16x16x1xi32>
    %c16_i32_13 = arith.constant 16 : i32
    %19 = vector.broadcast %c16_i32_13 : i32 to vector<16x16x1xi32>
    %20 = arith.cmpi slt, %13, %19 : vector<16x16x1xi32>
    %21 = arith.andi %18, %20 : vector<16x16x1xi1>
    %cst_14 = arith.constant 0.000000e+00 : f32
    %22 = vector.shape_cast %21 : vector<16x16x1xi1> to vector<16x16x1xi1>
    %23 = vector.broadcast %22 : vector<16x16x1xi1> to vector<16x16x128xi1>
    %24 = vector.broadcast %cst_14 : f32 to vector<16x16x128xf32>
    %25 = arith.select %23, %7, %24 : vector<16x16x128xi1>, vector<16x16x128xf32>
    %cst_15 = arith.constant dense<0.000000e+00> : vector<128xf32>
    %26 = vector.multi_reduction <add>, %25, %cst_15 [0, 1] : vector<16x16x128xf32> to vector<128xf32>
    %27 = vector.shape_cast %26 : vector<128xf32> to vector<1x1x128xf32>
    %28 = vector.shape_cast %27 : vector<1x1x128xf32> to vector<1x128xf32>
    %29 = arith.mulf %25, %25 : vector<16x16x128xf32>
    %cst_16 = arith.constant dense<0.000000e+00> : vector<128xf32>
    %30 = vector.multi_reduction <add>, %29, %cst_16 [0, 1] : vector<16x16x128xf32> to vector<128xf32>
    %31 = vector.shape_cast %30 : vector<128xf32> to vector<1x1x128xf32>
    %32 = vector.shape_cast %31 : vector<1x1x128xf32> to vector<1x128xf32>
    %33 = tpu.concatenate %28, %32 in 0 : vector<1x128xf32>, vector<1x128xf32> -> vector<2x128xf32>
    %c0_17 = arith.constant 0 : index
    %c0_18 = arith.constant 0 : index
    %c0_19 = arith.constant 0 : index
    %c0_20 = arith.constant 0 : index
    %34 = vector.load %arg5[%c0_17, %c0_18, %c0_19, %c0_20] : memref<1x1x2x128xf32, #tpu.memory_space<vmem>>, vector<1x1x2x128xf32>
    %35 = vector.shape_cast %34 : vector<1x1x2x128xf32> to vector<2x128xf32>
    %36 = vector.shape_cast %33 : vector<2x128xf32> to vector<1x1x2x128xf32>
    tpu.vector_store %arg5[%c0_17, %c0_18, %c0_19, %c0_20], %36 {strides = array<i32>} : memref<1x1x2x128xf32, #tpu.memory_space<vmem>>, vector<1x1x2x128xf32>,
    return
  }
  func.func @transform_0(%arg0: i32, %arg1: i32) -> (i32, i32, i32, i32, i32, i32) {
    %c0_i32 = arith.constant 0 : i32
    %c0_i32_0 = arith.constant 0 : i32
    %c0_i32_1 = arith.constant 0 : i32
    %c0_i32_2 = arith.constant 0 : i32
    %c0_i32_3 = arith.constant 0 : i32
    return %arg0, %arg1, %c0_i32, %c0_i32_0, %c0_i32_1, %c0_i32_2 : i32, i32, i32, i32, i32, i32
  }
  func.func @transform_1(%arg0: i32, %arg1: i32) -> (i32, i32) {
    %c0_i32 = arith.constant 0 : i32
    %c0_i32_0 = arith.constant 0 : i32
    %c0_i32_1 = arith.constant 0 : i32
    return %c0_i32, %c0_i32_0 : i32, i32
  }
  func.func @transform_2(%arg0: i32, %arg1: i32) -> (i32, i32, i32, i32) {
    %c0_i32 = arith.constant 0 : i32
    %c0_i32_0 = arith.constant 0 : i32
    %c0_i32_1 = arith.constant 0 : i32
    return %arg0, %arg1, %c0_i32, %c0_i32_0 : i32, i32, i32, i32
  }
  func.func @transform_3(%arg0: i32, %arg1: i32) -> (i32, i32, i32, i32) {
    %c0_i32 = arith.constant 0 : i32
    %c0_i32_0 = arith.constant 0 : i32
    %c0_i32_1 = arith.constant 0 : i32
    return %arg0, %arg1, %c0_i32, %c0_i32_0 : i32, i32, i32, i32
  }
}

</mosaic_0001>

<llo_original>
// kernel: tpu_custom_call.1
$region0: #{tpu_custom_call.1}
  #allocation0 [shape = 'u32[]', space=smem, size = 0x4, offset = 0x4, fixed_abs, tag = 'smem constant byte address 0x4 - core index']
  #allocation1 [shape = 'u32[144,128]{1,0:T(1,128)}', space=vmem, size = 0x12000, scoped, tag = 'internal scratch']
  %s0 = inlined_call_operand.hbm [shape: bf16[2,1,1,16,16,128], index: 0, kind: input, shape index: {}]
  %s1 = inlined_call_operand.hbm [shape: bf16[128,128], index: 1, kind: input, shape index: {}]
  %s2 = inlined_call_operand.hbm [shape: bf16[2,16,16,128], index: 2, kind: output, shape index: {0}]
  %s3 = inlined_call_operand.hbm [shape: f32[2,1,2,128], index: 3, kind: output, shape index: {1}]
  %4 = xla_tuple %s2, %s3
  %s5 = sld [smem:[#allocation0]]
  $region57: #{tpu_custom_call.1} parent=0
    _
  %s7 = ssub.s32 1, %s5
  %s8 = scalar_select 0, %s7, %s5
  $region1: #{tpu_custom_call.1} parent=0
    #allocation2 [shape = 'u8[131072]{0}', space=vmem, size = 0x20000, scoped, tag = 'input window, operand 0']
    #allocation3 [shape = 's32[2]{0}', space=sflag, size = 0x8, scoped, tag = 'scoped memory for tpu_custom_call.1']
    #allocation4 [shape = 's32[2]{0}', space=sflag, size = 0x8, scoped, tag = 'scoped memory for tpu_custom_call.1']
    #allocation5 [shape = 'u8[32768]{0}', space=vmem, size = 0x8000, scoped, tag = 'input window, operand 1, single buffered']
    #allocation6 [shape = 's32[1]{0}', space=sflag, size = 0x4, scoped, tag = 'scoped memory for tpu_custom_call.1']
    #allocation7 [shape = 'u8[131072]{0}', space=vmem, size = 0x20000, scoped, tag = 'output window, operand 0']
    #allocation8 [shape = 'u8[2048]{0}', space=vmem, size = 0x800, scoped, tag = 'output window, operand 1']
    #allocation9 [shape = 's32[2]{0}', space=sflag, size = 0x8, scoped, tag = 'scoped memory for tpu_custom_call.1']
    %9 = vsyncpa [#allocation3], 0
    %s10 = scalar_lea.sflag [#allocation3], 1
    %11 = vsyncpa %s10, 0
    %12 = vsyncpa [#allocation6], 0
    %13 = vsyncpa [#allocation4], 0
    %s14 = scalar_lea.sflag [#allocation4], 1
    %15 = vsyncpa %s14, 0
    %16 = vsyncpa [#allocation9], 0
    %s17 = scalar_lea.sflag [#allocation9], 1
    %18 = vsyncpa %s17, 0
    loop: start=0, step=1, limit=4
    $region2: #{tpu_custom_call.1} parent=1 // loop_pre_header
      _
    $region3: #{tpu_custom_call.1} parent=1 // loop_header
      %s20 = sphi 0, %s24
      %p21 = scmp.ge.s32.totalorder %s20, 4
      %s27 = sphi 0, %s39
      %s28 = sphi 0, %s35
      %s29 = sphi 0, %s27
      %s30 = sphi 0, %s28
      %s31 = sphi 0, %s29
      %s32 = sphi 0, %s30
      %s44 = sphi 0, %s46
      %s47 = sphi 0, %s44
      %s48 = sphi 0, %s47
      %s64 = sphi 0, %s48
      %s68 = sphi 0, %s68
      %s70 = sphi 0, %s68
      %s71 = sphi 0, %s70
      %s85 = sphi 0, %s71
      %s93 = sphi 0, %s95
      %s96 = sphi 0, %s93
      %s97 = sphi 0, %s96
      %s113 = sphi 0, %s97
      %s121 = sphi 0, %s123
      %s124 = sphi 0, %s121
      %s125 = sphi 0, %s124
      %s141 = sphi 0, %s125
    $region4: #{tpu_custom_call.1} parent=1 // loop_header_branch
      %23 = sbr.rel (%p21) target = $region8
    $region5: #{tpu_custom_call.1} parent=1 // loop_body
      %s25 = ssub.s32 %s20, 1
      %s26 = ssub.s32 %s20, 2
      %s33 = sadd.s32 1, %s28
      %p34 = scmp.ge.s32.totalorder %s33, 1
      %s35 = scalar_select %p34, 0, %s33
      %s36 = sadd.s32 1, %s27
      %s37 = scalar_select %p34, %s36, %s27
      %p38 = scmp.ge.s32.totalorder %s37, 2
      %s39 = scalar_select %p38, 0, %s37
      %s40 = ssub.s32 %s27, %s39
      %s41 = ssub.s32 %s28, %s35
      %s42 = sor.u32 %s40, %s41
      %p43 = scmp.eq.s32.totalorder %s42, 0
      %s45 = sadd.s32 %s44, 1
      %s46 = scalar_select %p43, %s44, %s45
      %p49 = pneg %p43
      %p50 = scmp.eq.s32.totalorder %s20, 1
      %p51 = por %p49, %p50
      %p52 = scmp.ne.s32.totalorder %s44, %s47
      %p53 = scmp.eq.s32.totalorder %s20, 0
      %p54 = por %p52, %p53
      %p55 = scmp.ne.s32.totalorder %s44, %s47
      %p56 = scmp.eq.s32.totalorder %s25, 1
      %p57 = por %p55, %p56
      %p58 = scmp.ne.s32.totalorder %s47, %s48
      %p59 = scmp.eq.s32.totalorder %s25, 0
      %p60 = por %p58, %p59
      %p61 = scmp.ne.s32.totalorder %s47, %s48
      %p62 = scmp.eq.s32.totalorder %s26, 1
      %p63 = por %p61, %p62
      %p65 = scmp.ne.s32.totalorder %s48, %s64
      %p66 = scmp.eq.s32.totalorder %s26, 0
      %p67 = por %p65, %p66
      %s69 = sadd.s32 %s68, 1
      %p72 = scmp.eq.s32.totalorder %s20, 1
      %p73 = scmp.ne.s32.totalorder %s68, %s70
      %p74 = scmp.eq.s32.totalorder %s20, 0
      %p75 = por %p73, %p74
      %p76 = scmp.ne.s32.totalorder %s68, %s70
      %p77 = scmp.eq.s32.totalorder %s25, 1
      %p78 = por %p76, %p77
      %p79 = scmp.ne.s32.totalorder %s70, %s71
      %p80 = scmp.eq.s32.totalorder %s25, 0
      %p81 = por %p79, %p80
      %p82 = scmp.ne.s32.totalorder %s70, %s71
      %p83 = scmp.eq.s32.totalorder %s26, 1
      %p84 = por %p82, %p83
      %p86 = scmp.ne.s32.totalorder %s71, %s85
      %p87 = scmp.eq.s32.totalorder %s26, 0
      %p88 = por %p86, %p87
      %s89 = ssub.s32 %s27, %s39
      %s90 = ssub.s32 %s28, %s35
      %s91 = sor.u32 %s89, %s90
      %p92 = scmp.eq.s32.totalorder %s91, 0
      %s94 = sadd.s32 %s93, 1
      %s95 = scalar_select %p92, %s93, %s94
      %p98 = pneg %p92
      %p99 = scmp.eq.s32.totalorder %s20, 1
      %p100 = por %p98, %p99
      %p101 = scmp.ne.s32.totalorder %s93, %s96
      %p102 = scmp.eq.s32.totalorder %s20, 0
      %p103 = por %p101, %p102
      %p104 = scmp.ne.s32.totalorder %s93, %s96
      %p105 = scmp.eq.s32.totalorder %s25, 1
      %p106 = por %p104, %p105
      %p107 = scmp.ne.s32.totalorder %s96, %s97
      %p108 = scmp.eq.s32.totalorder %s25, 0
      %p109 = por %p107, %p108
      %p110 = scmp.ne.s32.totalorder %s96, %s97
      %p111 = scmp.eq.s32.totalorder %s26, 1
      %p112 = por %p110, %p111
      %p114 = scmp.ne.s32.totalorder %s97, %s113
      %p115 = scmp.eq.s32.totalorder %s26, 0
      %p116 = por %p114, %p115
      %s117 = ssub.s32 %s27, %s39
      %s118 = ssub.s32 %s28, %s35
      %s119 = sor.u32 %s117, %s118
      %p120 = scmp.eq.s32.totalorder %s119, 0
      %s122 = sadd.s32 %s121, 1
      %s123 = scalar_select %p120, %s121, %s122
      %p126 = pneg %p120
      %p127 = scmp.eq.s32.totalorder %s20, 1
      %p128 = por %p126, %p127
      %p129 = scmp.ne.s32.totalorder %s121, %s124
      %p130 = scmp.eq.s32.totalorder %s20, 0
      %p131 = por %p129, %p130
      %p132 = scmp.ne.s32.totalorder %s121, %s124
      %p133 = scmp.eq.s32.totalorder %s25, 1
      %p134 = por %p132, %p133
      %p135 = scmp.ne.s32.totalorder %s124, %s125
      %p136 = scmp.eq.s32.totalorder %s25, 0
      %p137 = por %p135, %p136
      %p138 = scmp.ne.s32.totalorder %s124, %s125
      %p139 = scmp.eq.s32.totalorder %s26, 1
      %p140 = por %p138, %p139
      %p142 = scmp.ne.s32.totalorder %s125, %s141
      %p143 = scmp.eq.s32.totalorder %s26, 0
      %p144 = por %p142, %p143
      %p145 = scmp.le.s32.totalorder 1, %s20
      %p146 = scmp.lt.s32.totalorder %s20, 3
      %p147 = pnand %p145, %p146
      %p148 = pneg %p147
      // Predicated region
      $region9: #{tpu_custom_call.1} parent=5 // pred_check
        _
      $region10: #{tpu_custom_call.1} parent=5 // pred_check_branch
        %150 = sbr.rel (%p147) target = $region12
      $region11: #{tpu_custom_call.1} parent=5 // pred_region
        %s151 = ssub.s32 %s20, 1
        // Predicated region
        $region13: #{tpu_custom_call.1} parent=11 // pred_check
          %p152 = pneg %p81
        $region14: #{tpu_custom_call.1} parent=11 // pred_check_branch
          %154 = sbr.rel (%p152) target = $region16
        $region15: #{tpu_custom_call.1} parent=11 // pred_region
          %s156 = ssub.s32 1024, 1024
          %157 = vsyncadd [#allocation6], %s156
          %s158 = sshll.u32 [#allocation5], 4
          %s159 = int_to_ptr.vmem [resolvable:$true] %s158
          %164 = dma.hbm_to_vmem [thread:$0]  %s1, 1024, %s159, [#allocation6], 64, 64, 4
        $region16: #{tpu_custom_call.1} parent=11 // pred_fallthru
          _
      $region12: #{tpu_custom_call.1} parent=5 // pred_fallthru
        _
      %p165 = scmp.lt.s32.totalorder %s20, 2
      // Predicated region
      $region17: #{tpu_custom_call.1} parent=5 // pred_check
        %p166 = pneg %p165
      $region18: #{tpu_custom_call.1} parent=5 // pred_check_branch
        %168 = sbr.rel (%p166) target = $region20
      $region19: #{tpu_custom_call.1} parent=5 // pred_region
        // Predicated region
        $region21: #{tpu_custom_call.1} parent=19 // pred_check
          %p169 = pneg %p54
        $region22: #{tpu_custom_call.1} parent=19 // pred_check_branch
          %171 = sbr.rel (%p169) target = $region24
        $region23: #{tpu_custom_call.1} parent=19 // pred_region
          %s172 = sand.u32 %s44, 1
          %s173 = scalar_lea.sflag [#allocation3], %s172
          %s174 = sand.u32 %s44, 1
          %s175 = smul.addr %s174, 128
          %s176 = scalar_lea.vmem [#allocation2], %s175
          %s178 = ssub.s32 2048, 2048
          %179 = vsyncadd %s173, %s178
          %s180 = smul.addr %s28, 32
          %s181 = smul.addr %s27, 32
          %s182 = sadd.s32 %s180, %s181
          %s183 = smul.addr %s182, 64
          %s184 = scalar_lea.hbm %s0, %s183
          %s185 = sshll.u32 %s176, 4
          %s186 = int_to_ptr.vmem [resolvable:$true] %s185
          %191 = dma.hbm_to_vmem [thread:$0]  %s184, 2048, %s186, %s173, 64, 64, 4
        $region24: #{tpu_custom_call.1} parent=19 // pred_fallthru
          _
      $region20: #{tpu_custom_call.1} parent=5 // pred_fallthru
        _
      %p192 = scmp.le.s32.totalorder 1, %s20
      %p193 = scmp.lt.s32.totalorder %s20, 3
      %p194 = pnand %p192, %p193
      %p195 = pneg %p194
      // Predicated region
      $region25: #{tpu_custom_call.1} parent=5 // pred_check
        _
      $region26: #{tpu_custom_call.1} parent=5 // pred_check_branch
        %197 = sbr.rel (%p194) target = $region28
      $region27: #{tpu_custom_call.1} parent=5 // pred_region
        %s198 = ssub.s32 %s20, 1
        %s199 = sand.u32 %s47, 1
        %s200 = scalar_lea.sflag [#allocation3], %s199
        %s201 = sand.u32 %s47, 1
        %s202 = smul.addr %s201, 128
        %s203 = scalar_lea.vmem [#allocation2], %s202
        // Predicated region
        $region29: #{tpu_custom_call.1} parent=27 // pred_check
          %p204 = pneg %p60
        $region30: #{tpu_custom_call.1} parent=27 // pred_check_branch
          %206 = sbr.rel (%p204) target = $region32
        $region31: #{tpu_custom_call.1} parent=27 // pred_region
          %207 = dma.done %s200, 2048
        $region32: #{tpu_custom_call.1} parent=27 // pred_fallthru
          _
        // Predicated region
        $region33: #{tpu_custom_call.1} parent=27 // pred_check
          %p208 = pneg %p81
        $region34: #{tpu_custom_call.1} parent=27 // pred_check_branch
          %210 = sbr.rel (%p208) target = $region36
        $region35: #{tpu_custom_call.1} parent=27 // pred_region
          %211 = dma.done [#allocation6], 1024
        $region36: #{tpu_custom_call.1} parent=27 // pred_fallthru
          _
        %s212 = sand.u32 %s47, 1
        %s213 = scalar_lea.sflag [#allocation3], %s212
        %s214 = sand.u32 %s47, 1
        %s215 = smul.addr %s214, 128
        %s216 = scalar_lea.vmem [#allocation2], %s215
        %p217 = pneg %p60
        %p218 = pneg %p57
        %p219 = pneg %p81
        %p220 = pneg %p78
        %p221 = pneg %p109
        %p222 = pneg %p106
        %s223 = sand.u32 %s96, 1
        %s224 = scalar_lea.sflag [#allocation4], %s223
        %s225 = sand.u32 %s96, 1
        %s226 = smul.addr %s225, 128
        %s227 = scalar_lea.vmem [#allocation7], %s226
        %p228 = pneg %p137
        %p229 = pneg %p134
        %s230 = sand.u32 %s124, 1
        %s231 = scalar_lea.sflag [#allocation9], %s230
        %s232 = sand.u32 %s124, 1
        %s233 = smul.addr %s232, 2
        %s234 = scalar_lea.vmem [#allocation8], %s233
        %s235 = smul.u32 16, %s30
        %v237 = vld [vmem:[%s203] sm:$0xf]
        %v238 = vld [vmem:[%s203 + $0x4] sm:$0xf]
        %v239 = vld [vmem:[%s203 + $0x8] sm:$0xf]
        %v240 = vld [vmem:[%s203 + $0xc] sm:$0xf]
        %v241 = vld [vmem:[%s203 + $0x10] sm:$0xf]
        %v242 = vld [vmem:[%s203 + $0x14] sm:$0xf]
        %v243 = vld [vmem:[%s203 + $0x18] sm:$0xf]
        %v244 = vld [vmem:[%s203 + $0x1c] sm:$0xf]
        %v245 = vld [vmem:[%s203 + $0x20] sm:$0xf]
        %v246 = vld [vmem:[%s203 + $0x24] sm:$0xf]
        %v247 = vld [vmem:[%s203 + $0x28] sm:$0xf]
        %v248 = vld [vmem:[%s203 + $0x2c] sm:$0xf]
        %v249 = vld [vmem:[%s203 + $0x30] sm:$0xf]
        %v250 = vld [vmem:[%s203 + $0x34] sm:$0xf]
        %v251 = vld [vmem:[%s203 + $0x38] sm:$0xf]
        %v252 = vld [vmem:[%s203 + $0x3c] sm:$0xf]
        %v253 = vld [vmem:[%s203 + $0x40] sm:$0xf]
        %v254 = vld [vmem:[%s203 + $0x44] sm:$0xf]
        %v255 = vld [vmem:[%s203 + $0x48] sm:$0xf]
        %v256 = vld [vmem:[%s203 + $0x4c] sm:$0xf]
        %v257 = vld [vmem:[%s203 + $0x50] sm:$0xf]
        %v258 = vld [vmem:[%s203 + $0x54] sm:$0xf]
        %v259 = vld [vmem:[%s203 + $0x58] sm:$0xf]
        %v260 = vld [vmem:[%s203 + $0x5c] sm:$0xf]
        %v261 = vld [vmem:[%s203 + $0x60] sm:$0xf]
        %v262 = vld [vmem:[%s203 + $0x64] sm:$0xf]
        %v263 = vld [vmem:[%s203 + $0x68] sm:$0xf]
        %v264 = vld [vmem:[%s203 + $0x6c] sm:$0xf]
        %v265 = vld [vmem:[%s203 + $0x70] sm:$0xf]
        %v266 = vld [vmem:[%s203 + $0x74] sm:$0xf]
        %v267 = vld [vmem:[%s203 + $0x78] sm:$0xf]
        %v268 = vld [vmem:[%s203 + $0x7c] sm:$0xf]
        %v269 = vld [vmem:[#allocation5] sm:$0xf]
        %v270 = vld [vmem:[#allocation5 + $0x4] sm:$0xf]
        %v271 = vld [vmem:[#allocation5 + $0x8] sm:$0xf]
        %v272 = vld [vmem:[#allocation5 + $0xc] sm:$0xf]
        %v273 = vld [vmem:[#allocation5 + $0x10] sm:$0xf]
        %v274 = vld [vmem:[#allocation5 + $0x14] sm:$0xf]
        %v275 = vld [vmem:[#allocation5 + $0x18] sm:$0xf]
        %v276 = vld [vmem:[#allocation5 + $0x1c] sm:$0xf]
        %v277 = vld [vmem:[#allocation5 + $0x20] sm:$0xf]
        %v278 = vld [vmem:[#allocation5 + $0x24] sm:$0xf]
        %v279 = vld [vmem:[#allocation5 + $0x28] sm:$0xf]
        %v280 = vld [vmem:[#allocation5 + $0x2c] sm:$0xf]
        %v281 = vld [vmem:[#allocation5 + $0x30] sm:$0xf]
        %v282 = vld [vmem:[#allocation5 + $0x34] sm:$0xf]
        %v283 = vld [vmem:[#allocation5 + $0x38] sm:$0xf]
        %v284 = vld [vmem:[#allocation5 + $0x3c] sm:$0xf]
        %v317 = vunpack.c.l.b16 %v237
        %v318 = vunpack.c.l.b16 %v238
        %v319 = vunpack.c.l.b16 %v239
        %v320 = vunpack.c.l.b16 %v240
        %v321 = vunpack.c.l.b16 %v241
        %v322 = vunpack.c.l.b16 %v242
        %v323 = vunpack.c.l.b16 %v243
        %v324 = vunpack.c.l.b16 %v244
        %v325 = vunpack.c.l.b16 %v245
        %v326 = vunpack.c.l.b16 %v246
        %v327 = vunpack.c.l.b16 %v247
        %v328 = vunpack.c.l.b16 %v248
        %v329 = vunpack.c.l.b16 %v249
        %v330 = vunpack.c.l.b16 %v250
        %v331 = vunpack.c.l.b16 %v251
        %v332 = vunpack.c.l.b16 %v252
        %v333 = vunpack.c.l.b16 %v253
        %v334 = vunpack.c.l.b16 %v254
        %v335 = vunpack.c.l.b16 %v255
        %v336 = vunpack.c.l.b16 %v256
        %v337 = vunpack.c.l.b16 %v257
        %v338 = vunpack.c.l.b16 %v258
        %v339 = vunpack.c.l.b16 %v259
        %v340 = vunpack.c.l.b16 %v260
        %v341 = vunpack.c.l.b16 %v261
        %v342 = vunpack.c.l.b16 %v262
        %v343 = vunpack.c.l.b16 %v263
        %v344 = vunpack.c.l.b16 %v264
        %v345 = vunpack.c.l.b16 %v265
        %v346 = vunpack.c.l.b16 %v266
        %v347 = vunpack.c.l.b16 %v267
        %v348 = vunpack.c.l.b16 %v268
        %v349 = vpack.c.b16 %v318, %v317
        %v350 = vpack.c.b16 %v320, %v319
        %v351 = vpack.c.b16 %v322, %v321
        %v352 = vpack.c.b16 %v324, %v323
        %v353 = vpack.c.b16 %v326, %v325
        %v354 = vpack.c.b16 %v328, %v327
        %v355 = vpack.c.b16 %v330, %v329
        %v356 = vpack.c.b16 %v332, %v331
        %v357 = vpack.c.b16 %v334, %v333
        %v358 = vpack.c.b16 %v336, %v335
        %v359 = vpack.c.b16 %v338, %v337
        %v360 = vpack.c.b16 %v340, %v339
        %v361 = vpack.c.b16 %v342, %v341
        %v362 = vpack.c.b16 %v344, %v343
        %v363 = vpack.c.b16 %v346, %v345
        %v364 = vpack.c.b16 %v348, %v347
        %v397 = vunpack.c.l.b16 %v269
        %v398 = vunpack.c.l.b16 %v270
        %v399 = vunpack.c.l.b16 %v271
        %v400 = vunpack.c.l.b16 %v272
        %v401 = vunpack.c.l.b16 %v273
        %v402 = vunpack.c.l.b16 %v274
        %v403 = vunpack.c.l.b16 %v275
        %v404 = vunpack.c.l.b16 %v276
        %v405 = vunpack.c.l.b16 %v277
        %v406 = vunpack.c.l.b16 %v278
        %v407 = vunpack.c.l.b16 %v279
        %v408 = vunpack.c.l.b16 %v280
        %v409 = vunpack.c.l.b16 %v281
        %v410 = vunpack.c.l.b16 %v282
        %v411 = vunpack.c.l.b16 %v283
        %v412 = vunpack.c.l.b16 %v284
        %v413 = vpack.c.b16 %v398, %v397
        %v414 = vpack.c.b16 %v400, %v399
        %v415 = vpack.c.b16 %v402, %v401
        %v416 = vpack.c.b16 %v404, %v403
        %v417 = vpack.c.b16 %v406, %v405
        %v418 = vpack.c.b16 %v408, %v407
        %v419 = vpack.c.b16 %v410, %v409
        %v420 = vpack.c.b16 %v412, %v411
        %429 = vmatprep.subr.bf16.mxu0 0
        %430 = vmatpush1.bf16.msra.mxu0 %v413
        %431 = vmatprep.subr.bf16.mxu0 0
        %432 = vmatpush1.bf16.msra.mxu0 %v414
        %433 = vmatprep.subr.bf16.mxu0 0
        %434 = vmatpush1.bf16.msra.mxu0 %v415
        %435 = vmatprep.subr.bf16.mxu0 0
        %436 = vmatpush1.bf16.msra.mxu0 %v416
        %437 = vmatprep.subr.bf16.mxu0 0
        %438 = vmatpush1.bf16.msra.mxu0 %v417
        %439 = vmatprep.subr.bf16.mxu0 0
        %440 = vmatpush1.bf16.msra.mxu0 %v418
        %441 = vmatprep.subr.bf16.mxu0 0
        %442 = vmatpush1.bf16.msra.mxu0 %v419
        %443 = vmatprep.subr.bf16.mxu0 0
        %444 = vmatpush1.bf16.msra.mxu0 %v420
        %445 = vmatprep.subr.bf16.mxu0 0
        %446 = vmatpush1.bf16.msra.mxu0 0
        %447 = vmatprep.subr.bf16.mxu0 0
        %448 = vmatpush1.bf16.msra.mxu0 0
        %449 = vmatprep.subr.bf16.mxu0 0
        %450 = vmatpush1.bf16.msra.mxu0 0
        %451 = vmatprep.subr.bf16.mxu0 0
        %452 = vmatpush1.bf16.msra.mxu0 0
        %453 = vmatprep.subr.bf16.mxu0 0
        %454 = vmatpush1.bf16.msra.mxu0 0
        %455 = vmatprep.subr.bf16.mxu0 0
        %456 = vmatpush1.bf16.msra.mxu0 0
        %457 = vmatprep.subr.bf16.mxu0 0
        %458 = vmatpush1.bf16.msra.mxu0 0
        %459 = vmatprep.subr.bf16.mxu0 0
        %460 = vmatpush1.bf16.msra.mxu0 0
        %461 = vmatprep.mubr.bf16.mxu0 0
        %462 = vmatmul.mubr.bf16.gmra.mrb[0].mxu0 %v349
        %v463 = vpop.f32.mrb[0].mxu0
        %v464 = vadd.f32 0.0, %v463
        %v465 = vpop.f32.mrb[0].mxu0
        %v466 = vpop.f32.mrb[0].mxu0
        %v467 = vadd.f32 0.0, %v466
        %v468 = vpop.f32.mrb[0].mxu0
        %469 = vmatprep.mubr.bf16.mxu0 0
        %470 = vmatmul.mubr.bf16.gmra.mrb[0].mxu0 %v350
        %v471 = vpop.f32.mrb[0].mxu0
        %v472 = vadd.f32 0.0, %v471
        %v473 = vpop.f32.mrb[0].mxu0
        %v474 = vpop.f32.mrb[0].mxu0
        %v475 = vadd.f32 0.0, %v474
        %v476 = vpop.f32.mrb[0].mxu0
        %477 = vmatprep.mubr.bf16.mxu0 0
        %478 = vmatmul.mubr.bf16.gmra.mrb[0].mxu0 %v351
        %v479 = vpop.f32.mrb[0].mxu0
        %v480 = vadd.f32 0.0, %v479
        %v481 = vpop.f32.mrb[0].mxu0
        %v482 = vpop.f32.mrb[0].mxu0
        %v483 = vadd.f32 0.0, %v482
        %v484 = vpop.f32.mrb[0].mxu0
        %485 = vmatprep.mubr.bf16.mxu0 0
        %486 = vmatmul.mubr.bf16.gmra.mrb[0].mxu0 %v352
        %v487 = vpop.f32.mrb[0].mxu0
        %v488 = vadd.f32 0.0, %v487
        %v489 = vpop.f32.mrb[0].mxu0
        %v490 = vpop.f32.mrb[0].mxu0
        %v491 = vadd.f32 0.0, %v490
        %v492 = vpop.f32.mrb[0].mxu0
        %493 = vmatprep.mubr.bf16.mxu0 0
        %494 = vmatmul.mubr.bf16.gmra.mrb[0].mxu0 %v353
        %v495 = vpop.f32.mrb[0].mxu0
        %v496 = vadd.f32 0.0, %v495
        %v497 = vpop.f32.mrb[0].mxu0
        %v498 = vpop.f32.mrb[0].mxu0
        %v499 = vadd.f32 0.0, %v498
        %v500 = vpop.f32.mrb[0].mxu0
        %501 = vmatprep.mubr.bf16.mxu0 0
        %502 = vmatmul.mubr.bf16.gmra.mrb[0].mxu0 %v354
        %v503 = vpop.f32.mrb[0].mxu0
        %v504 = vadd.f32 0.0, %v503
        %v505 = vpop.f32.mrb[0].mxu0
        %v506 = vpop.f32.mrb[0].mxu0
        %v507 = vadd.f32 0.0, %v506
        %v508 = vpop.f32.mrb[0].mxu0
        %509 = vmatprep.mubr.bf16.mxu0 0
        %510 = vmatmul.mubr.bf16.gmra.mrb[0].mxu0 %v355
        %v511 = vpop.f32.mrb[0].mxu0
        %v512 = vadd.f32 0.0, %v511
        %v513 = vpop.f32.mrb[0].mxu0
        %v514 = vpop.f32.mrb[0].mxu0
        %v515 = vadd.f32 0.0, %v514
        %v516 = vpop.f32.mrb[0].mxu0
        %517 = vmatprep.mubr.bf16.mxu0 0
        %518 = vmatmul.mubr.bf16.gmra.mrb[0].mxu0 %v356
        %v519 = vpop.f32.mrb[0].mxu0
        %v520 = vadd.f32 0.0, %v519
        %v521 = vpop.f32.mrb[0].mxu0
        %v522 = vpop.f32.mrb[0].mxu0
        %v523 = vadd.f32 0.0, %v522
        %v524 = vpop.f32.mrb[0].mxu0
        %525 = vmatprep.mubr.bf16.mxu0 0
        %526 = vmatmul.mubr.bf16.gmra.mrb[0].mxu0 %v357
        %v527 = vpop.f32.mrb[0].mxu0
        %v528 = vadd.f32 0.0, %v527
        %v529 = vpop.f32.mrb[0].mxu0
        %v530 = vpop.f32.mrb[0].mxu0
        %v531 = vadd.f32 0.0, %v530
        %v532 = vpop.f32.mrb[0].mxu0
        %533 = vmatprep.mubr.bf16.mxu0 0
        %534 = vmatmul.mubr.bf16.gmra.mrb[0].mxu0 %v358
        %v535 = vpop.f32.mrb[0].mxu0
        %v536 = vadd.f32 0.0, %v535
        %v537 = vpop.f32.mrb[0].mxu0
        %v538 = vpop.f32.mrb[0].mxu0
        %v539 = vadd.f32 0.0, %v538
        %v540 = vpop.f32.mrb[0].mxu0
        %541 = vmatprep.mubr.bf16.mxu0 0
        %542 = vmatmul.mubr.bf16.gmra.mrb[0].mxu0 %v359
        %v543 = vpop.f32.mrb[0].mxu0
        %v544 = vadd.f32 0.0, %v543
        %v545 = vpop.f32.mrb[0].mxu0
        %v546 = vpop.f32.mrb[0].mxu0
        %v547 = vadd.f32 0.0, %v546
        %v548 = vpop.f32.mrb[0].mxu0
        %549 = vmatprep.mubr.bf16.mxu0 0
        %550 = vmatmul.mubr.bf16.gmra.mrb[0].mxu0 %v360
        %v551 = vpop.f32.mrb[0].mxu0
        %v552 = vadd.f32 0.0, %v551
        %v553 = vpop.f32.mrb[0].mxu0
        %v554 = vpop.f32.mrb[0].mxu0
        %v555 = vadd.f32 0.0, %v554
        %v556 = vpop.f32.mrb[0].mxu0
        %557 = vmatprep.mubr.bf16.mxu0 0
        %558 = vmatmul.mubr.bf16.gmra.mrb[0].mxu0 %v361
        %v559 = vpop.f32.mrb[0].mxu0
        %v560 = vadd.f32 0.0, %v559
        %v561 = vpop.f32.mrb[0].mxu0
        %v562 = vpop.f32.mrb[0].mxu0
        %v563 = vadd.f32 0.0, %v562
        %v564 = vpop.f32.mrb[0].mxu0
        %565 = vmatprep.mubr.bf16.mxu0 0
        %566 = vmatmul.mubr.bf16.gmra.mrb[0].mxu0 %v362
        %v567 = vpop.f32.mrb[0].mxu0
        %v568 = vadd.f32 0.0, %v567
        %v569 = vpop.f32.mrb[0].mxu0
        %v570 = vpop.f32.mrb[0].mxu0
        %v571 = vadd.f32 0.0, %v570
        %v572 = vpop.f32.mrb[0].mxu0
        %573 = vmatprep.mubr.bf16.mxu0 0
        %574 = vmatmul.mubr.bf16.gmra.mrb[0].mxu0 %v363
        %v575 = vpop.f32.mrb[0].mxu0
        %v576 = vadd.f32 0.0, %v575
        %v577 = vpop.f32.mrb[0].mxu0
        %v578 = vpop.f32.mrb[0].mxu0
        %v579 = vadd.f32 0.0, %v578
        %v580 = vpop.f32.mrb[0].mxu0
        %581 = vmatprep.mubr.bf16.mxu0 0
        %582 = vmatmul.mubr.bf16.gmra.mrb[0].mxu0 %v364
        %v583 = vpop.f32.mrb[0].mxu0
        %v584 = vadd.f32 0.0, %v583
        %v585 = vpop.f32.mrb[0].mxu0
        %v586 = vpop.f32.mrb[0].mxu0
        %v587 = vadd.f32 0.0, %v586
        %v588 = vpop.f32.mrb[0].mxu0
        %589 = vdwg.mxu0
        %v590 = vpack.c.bf16 %v467, %v464
        %v591 = vpack.c.bf16 %v475, %v472
        %v592 = vpack.c.bf16 %v483, %v480
        %v593 = vpack.c.bf16 %v491, %v488
        %v594 = vpack.c.bf16 %v499, %v496
        %v595 = vpack.c.bf16 %v507, %v504
        %v596 = vpack.c.bf16 %v515, %v512
        %v597 = vpack.c.bf16 %v523, %v520
        %v598 = vpack.c.bf16 %v531, %v528
        %v599 = vpack.c.bf16 %v539, %v536
        %v600 = vpack.c.bf16 %v547, %v544
        %v601 = vpack.c.bf16 %v555, %v552
        %v602 = vpack.c.bf16 %v563, %v560
        %v603 = vpack.c.bf16 %v571, %v568
        %v604 = vpack.c.bf16 %v579, %v576
        %v605 = vpack.c.bf16 %v587, %v584
        %v622 = vunpack.c.l.b16 %v590
        %v623 = vunpack.c.h.b16 %v590
        %v624 = vunpack.c.l.b16 %v591
        %v625 = vunpack.c.h.b16 %v591
        %v626 = vunpack.c.l.b16 %v592
        %v627 = vunpack.c.h.b16 %v592
        %v628 = vunpack.c.l.b16 %v593
        %v629 = vunpack.c.h.b16 %v593
        %v630 = vunpack.c.l.b16 %v594
        %v631 = vunpack.c.h.b16 %v594
        %v632 = vunpack.c.l.b16 %v595
        %v633 = vunpack.c.h.b16 %v595
        %v634 = vunpack.c.l.b16 %v596
        %v635 = vunpack.c.h.b16 %v596
        %v636 = vunpack.c.l.b16 %v597
        %v637 = vunpack.c.h.b16 %v597
        %v638 = vunpack.c.l.b16 %v598
        %v639 = vunpack.c.h.b16 %v598
        %v640 = vunpack.c.l.b16 %v599
        %v641 = vunpack.c.h.b16 %v599
        %v642 = vunpack.c.l.b16 %v600
        %v643 = vunpack.c.h.b16 %v600
        %v644 = vunpack.c.l.b16 %v601
        %v645 = vunpack.c.h.b16 %v601
        %v646 = vunpack.c.l.b16 %v602
        %v647 = vunpack.c.h.b16 %v602
        %v648 = vunpack.c.l.b16 %v603
        %v649 = vunpack.c.h.b16 %v603
        %v650 = vunpack.c.l.b16 %v604
        %v651 = vunpack.c.h.b16 %v604
        %v652 = vunpack.c.l.b16 %v605
        %v653 = vunpack.c.h.b16 %v605
        %v654 = vpack.c.b16 %v622, %v622
        %v655 = vpack.c.b16 %v623, %v623
        %v656 = vpack.c.b16 %v624, %v624
        %v657 = vpack.c.b16 %v625, %v625
        %v658 = vpack.c.b16 %v626, %v626
        %v659 = vpack.c.b16 %v627, %v627
        %v660 = vpack.c.b16 %v628, %v628
        %v661 = vpack.c.b16 %v629, %v629
        %v662 = vpack.c.b16 %v630, %v630
        %v663 = vpack.c.b16 %v631, %v631
        %v664 = vpack.c.b16 %v632, %v632
        %v665 = vpack.c.b16 %v633, %v633
        %v666 = vpack.c.b16 %v634, %v634
        %v667 = vpack.c.b16 %v635, %v635
        %v668 = vpack.c.b16 %v636, %v636
        %v669 = vpack.c.b16 %v637, %v637
        %v670 = vpack.c.b16 %v638, %v638
        %v671 = vpack.c.b16 %v639, %v639
        %v672 = vpack.c.b16 %v640, %v640
        %v673 = vpack.c.b16 %v641, %v641
        %v674 = vpack.c.b16 %v642, %v642
        %v675 = vpack.c.b16 %v643, %v643
        %v676 = vpack.c.b16 %v644, %v644
        %v677 = vpack.c.b16 %v645, %v645
        %v678 = vpack.c.b16 %v646, %v646
        %v679 = vpack.c.b16 %v647, %v647
        %v680 = vpack.c.b16 %v648, %v648
        %v681 = vpack.c.b16 %v649, %v649
        %v682 = vpack.c.b16 %v650, %v650
        %v683 = vpack.c.b16 %v651, %v651
        %v684 = vpack.c.b16 %v652, %v652
        %v685 = vpack.c.b16 %v653, %v653
        %718 = vst [vmem:[%s227] sm:$0xf] %v654
        %719 = vst [vmem:[%s227 + $0x4] sm:$0xf] %v655
        %720 = vst [vmem:[%s227 + $0x8] sm:$0xf] %v656
        %721 = vst [vmem:[%s227 + $0xc] sm:$0xf] %v657
        %722 = vst [vmem:[%s227 + $0x10] sm:$0xf] %v658
        %723 = vst [vmem:[%s227 + $0x14] sm:$0xf] %v659
        %724 = vst [vmem:[%s227 + $0x18] sm:$0xf] %v660
        %725 = vst [vmem:[%s227 + $0x1c] sm:$0xf] %v661
        %726 = vst [vmem:[%s227 + $0x20] sm:$0xf] %v662
        %727 = vst [vmem:[%s227 + $0x24] sm:$0xf] %v663
        %728 = vst [vmem:[%s227 + $0x28] sm:$0xf] %v664
        %729 = vst [vmem:[%s227 + $0x2c] sm:$0xf] %v665
        %730 = vst [vmem:[%s227 + $0x30] sm:$0xf] %v666
        %731 = vst [vmem:[%s227 + $0x34] sm:$0xf] %v667
        %732 = vst [vmem:[%s227 + $0x38] sm:$0xf] %v668
        %733 = vst [vmem:[%s227 + $0x3c] sm:$0xf] %v669
        %734 = vst [vmem:[%s227 + $0x40] sm:$0xf] %v670
        %735 = vst [vmem:[%s227 + $0x44] sm:$0xf] %v671
        %736 = vst [vmem:[%s227 + $0x48] sm:$0xf] %v672
        %737 = vst [vmem:[%s227 + $0x4c] sm:$0xf] %v673
        %738 = vst [vmem:[%s227 + $0x50] sm:$0xf] %v674
        %739 = vst [vmem:[%s227 + $0x54] sm:$0xf] %v675
        %740 = vst [vmem:[%s227 + $0x58] sm:$0xf] %v676
        %741 = vst [vmem:[%s227 + $0x5c] sm:$0xf] %v677
        %742 = vst [vmem:[%s227 + $0x60] sm:$0xf] %v678
        %743 = vst [vmem:[%s227 + $0x64] sm:$0xf] %v679
        %744 = vst [vmem:[%s227 + $0x68] sm:$0xf] %v680
        %745 = vst [vmem:[%s227 + $0x6c] sm:$0xf] %v681
        %746 = vst [vmem:[%s227 + $0x70] sm:$0xf] %v682
        %747 = vst [vmem:[%s227 + $0x74] sm:$0xf] %v683
        %748 = vst [vmem:[%s227 + $0x78] sm:$0xf] %v684
        %749 = vst [vmem:[%s227 + $0x7c] sm:$0xf] %v685
        %v750 = vlaneseq
        %v751 = vshrl.u32 %v750, 7
        %v752 = vadd.s32 %v751, 8
        %s753 = smul.u32 %s30, 16
        %v754 = vstv %s753
        %v755 = vadd.s32 %v754, 1
        %v756 = vadd.s32 %v754, 2
        %v757 = vadd.s32 %v754, 3
        %v758 = vadd.s32 %v754, 4
        %v759 = vadd.s32 %v754, 5
        %v760 = vadd.s32 %v754, 6
        %v761 = vadd.s32 %v754, 7
        %v762 = vadd.s32 %v754, 8
        %v763 = vadd.s32 %v754, 9
        %v764 = vadd.s32 %v754, 10
        %v765 = vadd.s32 %v754, 11
        %v766 = vadd.s32 %v754, 12
        %v767 = vadd.s32 %v754, 13
        %v768 = vadd.s32 %v754, 14
        %v769 = vadd.s32 %v754, 15
        %vm770 = vcmp.lt.s32.totalorder %v754, 16
        %vm771 = vcmp.lt.s32.totalorder %v755, 16
        %vm772 = vcmp.lt.s32.totalorder %v756, 16
        %vm773 = vcmp.lt.s32.totalorder %v757, 16
        %vm774 = vcmp.lt.s32.totalorder %v758, 16
        %vm775 = vcmp.lt.s32.totalorder %v759, 16
        %vm776 = vcmp.lt.s32.totalorder %v760, 16
        %vm777 = vcmp.lt.s32.totalorder %v761, 16
        %vm778 = vcmp.lt.s32.totalorder %v762, 16
        %vm779 = vcmp.lt.s32.totalorder %v763, 16
        %vm780 = vcmp.lt.s32.totalorder %v764, 16
        %vm781 = vcmp.lt.s32.totalorder %v765, 16
        %vm782 = vcmp.lt.s32.totalorder %v766, 16
        %vm783 = vcmp.lt.s32.totalorder %v767, 16
        %vm784 = vcmp.lt.s32.totalorder %v768, 16
        %vm785 = vcmp.lt.s32.totalorder %v769, 16
        %vm786 = vcmp.lt.s32.totalorder %v751, 16
        %vm787 = vcmp.lt.s32.totalorder %v752, 16
        %vm788 = vmand %vm770, %vm786
        %vm789 = vmand %vm770, %vm787
        %vm790 = vmand %vm771, %vm786
        %vm791 = vmand %vm771, %vm787
        %vm792 = vmand %vm772, %vm786
        %vm793 = vmand %vm772, %vm787
        %vm794 = vmand %vm773, %vm786
        %vm795 = vmand %vm773, %vm787
        %vm796 = vmand %vm774, %vm786
        %vm797 = vmand %vm774, %vm787
        %vm798 = vmand %vm775, %vm786
        %vm799 = vmand %vm775, %vm787
        %vm800 = vmand %vm776, %vm786
        %vm801 = vmand %vm776, %vm787
        %vm802 = vmand %vm777, %vm786
        %vm803 = vmand %vm777, %vm787
        %vm804 = vmand %vm778, %vm786
        %vm805 = vmand %vm778, %vm787
        %vm806 = vmand %vm779, %vm786
        %vm807 = vmand %vm779, %vm787
        %vm808 = vmand %vm780, %vm786
        %vm809 = vmand %vm780, %vm787
        %vm810 = vmand %vm781, %vm786
        %vm811 = vmand %vm781, %vm787
        %vm812 = vmand %vm782, %vm786
        %vm813 = vmand %vm782, %vm787
        %vm814 = vmand %vm783, %vm786
        %vm815 = vmand %vm783, %vm787
        %vm816 = vmand %vm784, %vm786
        %vm817 = vmand %vm784, %vm787
        %vm818 = vmand %vm785, %vm786
        %vm819 = vmand %vm785, %vm787
        %v820 = vsel %vm788, 1, 0
        %v821 = vsel %vm789, 1, 0
        %v822 = vsel %vm790, 1, 0
        %v823 = vsel %vm791, 1, 0
        %v824 = vsel %vm792, 1, 0
        %v825 = vsel %vm793, 1, 0
        %v826 = vsel %vm794, 1, 0
        %v827 = vsel %vm795, 1, 0
        %v828 = vsel %vm796, 1, 0
        %v829 = vsel %vm797, 1, 0
        %v830 = vsel %vm798, 1, 0
        %v831 = vsel %vm799, 1, 0
        %v832 = vsel %vm800, 1, 0
        %v833 = vsel %vm801, 1, 0
        %v834 = vsel %vm802, 1, 0
        %v835 = vsel %vm803, 1, 0
        %v836 = vsel %vm804, 1, 0
        %v837 = vsel %vm805, 1, 0
        %v838 = vsel %vm806, 1, 0
        %v839 = vsel %vm807, 1, 0
        %v840 = vsel %vm808, 1, 0
        %v841 = vsel %vm809, 1, 0
        %v842 = vsel %vm810, 1, 0
        %v843 = vsel %vm811, 1, 0
        %v844 = vsel %vm812, 1, 0
        %v845 = vsel %vm813, 1, 0
        %v846 = vsel %vm814, 1, 0
        %v847 = vsel %vm815, 1, 0
        %v848 = vsel %vm816, 1, 0
        %v849 = vsel %vm817, 1, 0
        %v850 = vsel %vm818, 1, 0
        %v851 = vsel %vm819, 1, 0
        %vm852 = vcmp.eq.s32.totalorder %v820, 1
        %vm853 = vcmp.eq.s32.totalorder %v821, 1
        %vm854 = vcmp.eq.s32.totalorder %v822, 1
        %vm855 = vcmp.eq.s32.totalorder %v823, 1
        %vm856 = vcmp.eq.s32.totalorder %v824, 1
        %vm857 = vcmp.eq.s32.totalorder %v825, 1
        %vm858 = vcmp.eq.s32.totalorder %v826, 1
        %vm859 = vcmp.eq.s32.totalorder %v827, 1
        %vm860 = vcmp.eq.s32.totalorder %v828, 1
        %vm861 = vcmp.eq.s32.totalorder %v829, 1
        %vm862 = vcmp.eq.s32.totalorder %v830, 1
        %vm863 = vcmp.eq.s32.totalorder %v831, 1
        %vm864 = vcmp.eq.s32.totalorder %v832, 1
        %vm865 = vcmp.eq.s32.totalorder %v833, 1
        %vm866 = vcmp.eq.s32.totalorder %v834, 1
        %vm867 = vcmp.eq.s32.totalorder %v835, 1
        %vm868 = vcmp.eq.s32.totalorder %v836, 1
        %vm869 = vcmp.eq.s32.totalorder %v837, 1
        %vm870 = vcmp.eq.s32.totalorder %v838, 1
        %vm871 = vcmp.eq.s32.totalorder %v839, 1
        %vm872 = vcmp.eq.s32.totalorder %v840, 1
        %vm873 = vcmp.eq.s32.totalorder %v841, 1
        %vm874 = vcmp.eq.s32.totalorder %v842, 1
        %vm875 = vcmp.eq.s32.totalorder %v843, 1
        %vm876 = vcmp.eq.s32.totalorder %v844, 1
        %vm877 = vcmp.eq.s32.totalorder %v845, 1
        %vm878 = vcmp.eq.s32.totalorder %v846, 1
        %vm879 = vcmp.eq.s32.totalorder %v847, 1
        %vm880 = vcmp.eq.s32.totalorder %v848, 1
        %vm881 = vcmp.eq.s32.totalorder %v849, 1
        %vm882 = vcmp.eq.s32.totalorder %v850, 1
        %vm883 = vcmp.eq.s32.totalorder %v851, 1
        %v884 = vsel %vm852, %v464, 0.0
        %v885 = vsel %vm853, %v467, 0.0
        %v886 = vsel %vm854, %v472, 0.0
        %v887 = vsel %vm855, %v475, 0.0
        %v888 = vsel %vm856, %v480, 0.0
        %v889 = vsel %vm857, %v483, 0.0
        %v890 = vsel %vm858, %v488, 0.0
        %v891 = vsel %vm859, %v491, 0.0
        %v892 = vsel %vm860, %v496, 0.0
        %v893 = vsel %vm861, %v499, 0.0
        %v894 = vsel %vm862, %v504, 0.0
        %v895 = vsel %vm863, %v507, 0.0
        %v896 = vsel %vm864, %v512, 0.0
        %v897 = vsel %vm865, %v515, 0.0
        %v898 = vsel %vm866, %v520, 0.0
        %v899 = vsel %vm867, %v523, 0.0
        %v900 = vsel %vm868, %v528, 0.0
        %v901 = vsel %vm869, %v531, 0.0
        %v902 = vsel %vm870, %v536, 0.0
        %v903 = vsel %vm871, %v539, 0.0
        %v904 = vsel %vm872, %v544, 0.0
        %v905 = vsel %vm873, %v547, 0.0
        %v906 = vsel %vm874, %v552, 0.0
        %v907 = vsel %vm875, %v555, 0.0
        %v908 = vsel %vm876, %v560, 0.0
        %v909 = vsel %vm877, %v563, 0.0
        %v910 = vsel %vm878, %v568, 0.0
        %v911 = vsel %vm879, %v571, 0.0
        %v912 = vsel %vm880, %v576, 0.0
        %v913 = vsel %vm881, %v579, 0.0
        %v914 = vsel %vm882, %v584, 0.0
        %v915 = vsel %vm883, %v587, 0.0
        %v916 = vadd.f32 %v884, %v885
        %v917 = vadd.f32 %v916, %v886
        %v918 = vadd.f32 %v917, %v887
        %v919 = vadd.f32 %v918, %v888
        %v920 = vadd.f32 %v919, %v889
        %v921 = vadd.f32 %v920, %v890
        %v922 = vadd.f32 %v921, %v891
        %v923 = vadd.f32 %v922, %v892
        %v924 = vadd.f32 %v923, %v893
        %v925 = vadd.f32 %v924, %v894
        %v926 = vadd.f32 %v925, %v895
        %v927 = vadd.f32 %v926, %v896
        %v928 = vadd.f32 %v927, %v897
        %v929 = vadd.f32 %v928, %v898
        %v930 = vadd.f32 %v929, %v899
        %v931 = vadd.f32 %v930, %v900
        %v932 = vadd.f32 %v931, %v901
        %v933 = vadd.f32 %v932, %v902
        %v934 = vadd.f32 %v933, %v903
        %v935 = vadd.f32 %v934, %v904
        %v936 = vadd.f32 %v935, %v905
        %v937 = vadd.f32 %v936, %v906
        %v938 = vadd.f32 %v937, %v907
        %v939 = vadd.f32 %v938, %v908
        %v940 = vadd.f32 %v939, %v909
        %v941 = vadd.f32 %v940, %v910
        %v942 = vadd.f32 %v941, %v911
        %v943 = vadd.f32 %v942, %v912
        %v944 = vadd.f32 %v943, %v913
        %v945 = vadd.f32 %v944, %v914
        %v946 = vadd.f32 %v945, %v915
        %v947 = vrot.slane %v946, 4
        %v948 = vadd.f32 %v946, %v947
        %v949 = vrot.slane %v948, 2
        %v950 = vadd.f32 %v948, %v949
        %v951 = vrot.slane %v950, 1
        %v952 = vadd.f32 %v950, %v951
        %v953 = vmul.f32 %v884, %v884
        %v954 = vmul.f32 %v885, %v885
        %v955 = vmul.f32 %v886, %v886
        %v956 = vmul.f32 %v887, %v887
        %v957 = vmul.f32 %v888, %v888
        %v958 = vmul.f32 %v889, %v889
        %v959 = vmul.f32 %v890, %v890
        %v960 = vmul.f32 %v891, %v891
        %v961 = vmul.f32 %v892, %v892
        %v962 = vmul.f32 %v893, %v893
        %v963 = vmul.f32 %v894, %v894
        %v964 = vmul.f32 %v895, %v895
        %v965 = vmul.f32 %v896, %v896
        %v966 = vmul.f32 %v897, %v897
        %v967 = vmul.f32 %v898, %v898
        %v968 = vmul.f32 %v899, %v899
        %v969 = vmul.f32 %v900, %v900
        %v970 = vmul.f32 %v901, %v901
        %v971 = vmul.f32 %v902, %v902
        %v972 = vmul.f32 %v903, %v903
        %v973 = vmul.f32 %v904, %v904
        %v974 = vmul.f32 %v905, %v905
        %v975 = vmul.f32 %v906, %v906
        %v976 = vmul.f32 %v907, %v907
        %v977 = vmul.f32 %v908, %v908
        %v978 = vmul.f32 %v909, %v909
        %v979 = vmul.f32 %v910, %v910
        %v980 = vmul.f32 %v911, %v911
        %v981 = vmul.f32 %v912, %v912
        %v982 = vmul.f32 %v913, %v913
        %v983 = vmul.f32 %v914, %v914
        %v984 = vmul.f32 %v915, %v915
        %v985 = vadd.f32 %v953, %v954
        %v986 = vadd.f32 %v985, %v955
        %v987 = vadd.f32 %v986, %v956
        %v988 = vadd.f32 %v987, %v957
        %v989 = vadd.f32 %v988, %v958
        %v990 = vadd.f32 %v989, %v959
        %v991 = vadd.f32 %v990, %v960
        %v992 = vadd.f32 %v991, %v961
        %v993 = vadd.f32 %v992, %v962
        %v994 = vadd.f32 %v993, %v963
        %v995 = vadd.f32 %v994, %v964
        %v996 = vadd.f32 %v995, %v965
        %v997 = vadd.f32 %v996, %v966
        %v998 = vadd.f32 %v997, %v967
        %v999 = vadd.f32 %v998, %v968
        %v1000 = vadd.f32 %v999, %v969
        %v1001 = vadd.f32 %v1000, %v970
        %v1002 = vadd.f32 %v1001, %v971
        %v1003 = vadd.f32 %v1002, %v972
        %v1004 = vadd.f32 %v1003, %v973
        %v1005 = vadd.f32 %v1004, %v974
        %v1006 = vadd.f32 %v1005, %v975
        %v1007 = vadd.f32 %v1006, %v976
        %v1008 = vadd.f32 %v1007, %v977
        %v1009 = vadd.f32 %v1008, %v978
        %v1010 = vadd.f32 %v1009, %v979
        %v1011 = vadd.f32 %v1010, %v980
        %v1012 = vadd.f32 %v1011, %v981
        %v1013 = vadd.f32 %v1012, %v982
        %v1014 = vadd.f32 %v1013, %v983
        %v1015 = vadd.f32 %v1014, %v984
        %v1016 = vrot.slane %v1015, 4
        %v1017 = vadd.f32 %v1015, %v1016
        %v1018 = vrot.slane %v1017, 2
        %v1019 = vadd.f32 %v1017, %v1018
        %v1020 = vrot.slane %v1019, 1
        %v1021 = vadd.f32 %v1019, %v1020
        %vm1022 = vcmask 1040384
        %v1023 = vsel %vm1022, %v952, %v1021
        %1024 = vst [vmem:[%s234] sm:$0x3] %v1023
        %s1025 = sand.u32 %s96, 1
        %s1026 = scalar_lea.sflag [#allocation4], %s1025
        %s1027 = sand.u32 %s96, 1
        %s1028 = smul.addr %s1027, 128
        %s1029 = scalar_lea.vmem [#allocation7], %s1028
        %s1030 = sand.u32 %s124, 1
        %s1031 = scalar_lea.sflag [#allocation9], %s1030
        %s1032 = sand.u32 %s124, 1
        %s1033 = smul.addr %s1032, 2
        %s1034 = scalar_lea.vmem [#allocation8], %s1033
        // Predicated region
        $region37: #{tpu_custom_call.1} parent=27 // pred_check
          %p1035 = pneg %p106
        $region38: #{tpu_custom_call.1} parent=27 // pred_check_branch
          %1037 = sbr.rel (%p1035) target = $region40
        $region39: #{tpu_custom_call.1} parent=27 // pred_region
          %s1038 = smul.u32 16, %s30
          %s1040 = ssub.s32 2048, 2048
          %1041 = vsyncadd %s1026, %s1040
          %s1042 = smul.addr %s1038, 2
          %s1043 = smul.addr %s29, 32
          %s1044 = sadd.s32 %s1042, %s1043
          %s1045 = smul.addr %s1044, 64
          %s1046 = scalar_lea.hbm %s2, %s1045
          %s1047 = sshll.u32 %s1029, 4
          %s1048 = int_to_ptr.vmem [resolvable:$true] %s1047
          %1053 = dma.vmem_to_hbm [thread:$0]  %s1048, 2048, %s1046, %s1026, 64, 64, 4
        $region40: #{tpu_custom_call.1} parent=27 // pred_fallthru
          _
        // Predicated region
        $region41: #{tpu_custom_call.1} parent=27 // pred_check
          %p1054 = pneg %p134
        $region42: #{tpu_custom_call.1} parent=27 // pred_check_branch
          %1056 = sbr.rel (%p1054) target = $region44
        $region43: #{tpu_custom_call.1} parent=27 // pred_region
          %s1058 = ssub.s32 32, 32
          %1059 = vsyncadd %s1031, %s1058
          %s1060 = sadd.s32 %s30, %s29
          %s1061 = smul.addr %s1060, 32
          %s1062 = scalar_lea.hbm %s3, %s1061
          %s1064 = sshll.u32 %s1034, 4
          %s1065 = int_to_ptr.vmem [resolvable:$true] %s1064
          %1067 = dma.vmem_to_hbm [thread:$0]  %s1065, 32, %s1062, %s1031
        $region44: #{tpu_custom_call.1} parent=27 // pred_fallthru
          _
      $region28: #{tpu_custom_call.1} parent=5 // pred_fallthru
        _
      %p1068 = scmp.le.s32.totalorder 2, %s20
      // Predicated region
      $region45: #{tpu_custom_call.1} parent=5 // pred_check
        %p1069 = pneg %p1068
      $region46: #{tpu_custom_call.1} parent=5 // pred_check_branch
        %1071 = sbr.rel (%p1069) target = $region48
      $region47: #{tpu_custom_call.1} parent=5 // pred_region
        %s1072 = ssub.s32 %s20, 2
        // Predicated region
        $region49: #{tpu_custom_call.1} parent=47 // pred_check
          %p1073 = pneg %p112
        $region50: #{tpu_custom_call.1} parent=47 // pred_check_branch
          %1075 = sbr.rel (%p1073) target = $region52
        $region51: #{tpu_custom_call.1} parent=47 // pred_region
          %s1076 = sand.u32 %s97, 1
          %s1077 = scalar_lea.sflag [#allocation4], %s1076
          %s1078 = sand.u32 %s97, 1
          %s1079 = smul.addr %s1078, 128
          %s1080 = scalar_lea.vmem [#allocation7], %s1079
          %1081 = dma.done %s1077, 2048
        $region52: #{tpu_custom_call.1} parent=47 // pred_fallthru
          _
        // Predicated region
        $region53: #{tpu_custom_call.1} parent=47 // pred_check
          %p1082 = pneg %p140
        $region54: #{tpu_custom_call.1} parent=47 // pred_check_branch
          %1084 = sbr.rel (%p1082) target = $region56
        $region55: #{tpu_custom_call.1} parent=47 // pred_region
          %s1085 = sand.u32 %s125, 1
          %s1086 = scalar_lea.sflag [#allocation9], %s1085
          %s1087 = sand.u32 %s125, 1
          %s1088 = smul.addr %s1087, 2
          %s1089 = scalar_lea.vmem [#allocation8], %s1088
          %1090 = dma.done %s1086, 32
        $region56: #{tpu_custom_call.1} parent=47 // pred_fallthru
          _
      $region48: #{tpu_custom_call.1} parent=5 // pred_fallthru
        _
    $region6: #{tpu_custom_call.1} parent=1 // loop_footer
      %s24 = sadd.s32 1, %s20
    $region7: #{tpu_custom_call.1} parent=1 // loop_footer_branch
      %19 = sbr.rel target = $region3
    $region8: #{tpu_custom_call.1} parent=1 // loop_exit
      _
    %1091 = vsyncpa [#allocation3], 1
    %s1092 = scalar_lea.sflag [#allocation3], 1
    %1093 = vsyncpa %s1092, 1
    %1094 = vsyncpa [#allocation6], 1
    %1095 = vsyncpa [#allocation4], 1
    %s1096 = scalar_lea.sflag [#allocation4], 1
    %1097 = vsyncpa %s1096, 1
    %1098 = vsyncpa [#allocation9], 1
    %s1099 = scalar_lea.sflag [#allocation9], 1
    %1100 = vsyncpa %s1099, 1

</llo_original>
